<compile_context>
chip_gen: v6e
topology: v6e:2x2x1
jax: 0.10.0
libtpu: 0.0.40
codegen_flags: <defaults>
</compile_context>

<pallas_src>
import functools

import jax
import jax.numpy as jnp
import numpy as np
from jax import lax
from jax.experimental import pallas as pl
from jax.experimental.pallas import tpu as pltpu

EPS_BN = 1e-5   # nn.BatchNorm2d default eps
EPS_LN = 1e-5   # nn.LayerNorm default eps
_VMEM_LIMIT = 64 * 1024 * 1024
_TILE_M = 1024  # lane-axis tile for the conv matmul / BN kernels


# ------------------------------------------------------------- in-kernel math

def _ln_cols(x, g, b):
    # LayerNorm over axis 0 (channel axis of a (C, N) tile). g, b: (C, 1)
    mu = jnp.mean(x, axis=0, keepdims=True)
    d = x - mu
    var = jnp.mean(d * d, axis=0, keepdims=True)
    return d * lax.rsqrt(var + EPS_LN) * g + b


def _gelu(x):
    # TODO(synk): tanh approximation (PyTorch nn.GELU default is exact erf).
    return 0.5 * x * (1.0 + jnp.tanh(0.7978845608028654 * (x + 0.044715 * x * x * x)))


def _attn_mlp_tail(x, qT, kvT, wp_ref, bp, l2g, l2b, w1_ref, b1, w2_ref, b2,
                   heads, hd, scale):
    # x: (C, N) residual stream; qT: (C, N); kvT: (2C, Nk)  (channel-major).
    C = heads * hd
    qb = qT.astype(jnp.bfloat16)
    kvb = kvT.astype(jnp.bfloat16)
    outs = []
    for h in range(heads):
        q_h = qb[h * hd:(h + 1) * hd, :]                 # (hd, N)
        k_h = kvb[h * hd:(h + 1) * hd, :]                # (hd, Nk)
        v_h = kvb[C + h * hd:C + (h + 1) * hd, :]        # (hd, Nk)
        s = lax.dot_general(q_h, k_h, (((0,), (0,)), ((), ())),
                            preferred_element_type=jnp.float32) * scale   # (N, Nk)
        s = s - jnp.max(s, axis=-1, keepdims=True)
        p = jnp.exp(s)
        p = p * pl.reciprocal(jnp.sum(p, axis=-1, keepdims=True), approx=True)
        o_h = lax.dot_general(v_h, p.astype(jnp.bfloat16), (((1,), (1,)), ((), ())),
                              preferred_element_type=jnp.float32)         # (hd, N)
        outs.append(o_h)
    o_cat = outs[0] if heads == 1 else jnp.concatenate(outs, axis=0)       # (C, N)
    attn = jnp.dot(wp_ref[...], o_cat.astype(jnp.bfloat16),
                   preferred_element_type=jnp.float32) + bp                # (C, N)
    x = x + attn
    z = _ln_cols(x, l2g, l2b)
    # TODO(synk): tile the MLP over N (fori_loop, unroll) at production N.
    hmid = _gelu(jnp.dot(w1_ref[...], z.astype(jnp.bfloat16),
                         preferred_element_type=jnp.float32) + b1)         # (hidden, N)
    return x + jnp.dot(w2_ref[...], hmid.astype(jnp.bfloat16),
                       preferred_element_type=jnp.float32) + b2


# ------------------------------------------------------------------- kernels

def _conv_mm_kernel(x_ref, w_ref, cb_ref, o_ref, *, relu):
    # x_ref: (CKK, TM) bf16 im2col tile; w_ref: (Cout, CKK) bf16; cb_ref: (Cout, 1)
    acc = jnp.dot(w_ref[...], x_ref[...], preferred_element_type=jnp.float32)
    acc = acc + cb_ref[...]
    if relu:
        acc = jnp.maximum(acc, 0.0)
    o_ref[...] = acc


def _conv_mm_stats_kernel(x_ref, w_ref, cb_ref, y_ref, sum_ref, sq_ref):
    # Pass 1 of conv + BN: tiled matmul + bias, accumulate per-channel sum/sumsq
    # in resident accumulator outputs across the 'arbitrary' M axis.
    acc = jnp.dot(w_ref[...], x_ref[...], preferred_element_type=jnp.float32)
    acc = acc + cb_ref[...]
    y_ref[...] = acc

    @pl.when(pl.program_id(0) == 0)
    def _():
        sum_ref[...] = jnp.zeros_like(sum_ref)
        sq_ref[...] = jnp.zeros_like(sq_ref)

    sum_ref[...] += jnp.sum(acc, axis=1, keepdims=True)
    sq_ref[...] += jnp.sum(acc * acc, axis=1, keepdims=True)


def _bn_relu_kernel(y_ref, s1_ref, s2_ref, g_ref, b_ref, o_ref, *, relu, inv_n):
    # Pass 2 of conv + BN: normalize with train-mode batch stats (+ optional ReLU).
    mu = s1_ref[...] * inv_n                               # (Cout, 1)
    var = s2_ref[...] * inv_n - mu * mu                    # biased variance
    y = (y_ref[...] - mu) * lax.rsqrt(var + EPS_BN) * g_ref[...] + b_ref[...]
    if relu:
        y = jnp.maximum(y, 0.0)
    o_ref[...] = y


def _pa_kernel(xp_ref, w_ref, b_ref, o_ref, *, H, W):
    # PA: x * sigmoid(depthwise 3x3(x) + b).  xp_ref: (1, C, H+2, W+2) padded
    # activation; the 9 taps are formed in-kernel as static slices (no im2col).
    xp = xp_ref[0]                                         # (C, H+2, W+2)
    z = None
    for di in range(3):
        for dj in range(3):
            tap = xp[:, di:di + H, dj:dj + W]              # (C, H, W)
            contrib = w_ref[di * 3 + dj] * tap             # w: (C, 1, 1)
            z = contrib if z is None else z + contrib
    z = z + b_ref[...]
    gate = 1.0 / (1.0 + jnp.exp(-z))
    o_ref[0] = xp[:, 1:1 + H, 1:1 + W] * gate


def _ln_ch_kernel(x_ref, g_ref, b_ref, o_ref):
    # LayerNorm over the channel (sublane) axis of a (C, N) tile.
    o_ref[0] = _ln_cols(x_ref[0], g_ref[...], b_ref[...])


def _block_sr1_kernel(x_ref, wq_ref, wkv_ref, wp_ref, bp_ref,
                      l1g_ref, l1b_ref, l2g_ref, l2b_ref,
                      w1_ref, b1_ref, w2_ref, b2_ref, o_ref, *, heads, hd, scale):
    x = x_ref[0]                                           # (C, N)
    y = _ln_cols(x, l1g_ref[...], l1b_ref[...])
    yb = y.astype(jnp.bfloat16)
    qT = jnp.dot(wq_ref[...], yb, preferred_element_type=jnp.float32)      # (C, N)
    kvT = jnp.dot(wkv_ref[...], yb, preferred_element_type=jnp.float32)    # (2C, N)
    o_ref[0] = _attn_mlp_tail(x, qT, kvT, wp_ref, bp_ref[...],
                              l2g_ref[...], l2b_ref[...],
                              w1_ref, b1_ref[...], w2_ref, b2_ref[...],
                              heads, hd, scale)


def _block_srn_kernel(x_ref, y_ref, taps_ref, wsr_ref, bsr_ref, sg_ref, sb_ref,
                      wq_ref, wkv_ref, wp_ref, bp_ref, l2g_ref, l2b_ref,
                      w1_ref, b1_ref, w2_ref, b2_ref, o_ref,
                      *, heads, hd, scale, kk):
    x = x_ref[0]                                           # (C, N)
    y = y_ref[0]                                           # (C, N) = LN1(x)
    # depthwise sr conv from pre-extracted strided taps of y (per batch).
    dw = bsr_ref[...] + wsr_ref[0] * taps_ref[0, 0]        # (C, Nk)
    for t in range(1, kk):
        dw = dw + wsr_ref[t] * taps_ref[0, t]
    ykv = _ln_cols(dw, sg_ref[...], sb_ref[...])           # sr_norm, (C, Nk)
    qT = jnp.dot(wq_ref[...], y.astype(jnp.bfloat16),
                 preferred_element_type=jnp.float32)       # (C, N)
    kvT = jnp.dot(wkv_ref[...], ykv.astype(jnp.bfloat16),
                  preferred_element_type=jnp.float32)      # (2C, Nk)
    o_ref[0] = _attn_mlp_tail(x, qT, kvT, wp_ref, bp_ref[...],
                              l2g_ref[...], l2b_ref[...],
                              w1_ref, b1_ref[...], w2_ref, b2_ref[...],
                              heads, hd, scale)


# -------------------------------------------------------------- pallas wrappers

def _rep(shape):
    nd = len(shape)
    return pl.BlockSpec(shape, lambda *_, nd=nd: (0,) * nd)


def _pick_tile(M, cap=_TILE_M):
    if M <= cap:
        return M
    for t in (1024, 512, 256, 128):
        if t <= cap and M % t == 0:
            return t
    return M


def _conv_bn_act(x, w, bias, stride, pad, *, bn, relu):
    # x: (B, Cin, H, W); w: (Cout, Cin, K, K); bias: (Cout,) or None
    B, Cin, H, W = x.shape
    Cout, _, K, _ = w.shape
    Ho = (H + 2 * pad - K) // stride + 1
    Wo = (W + 2 * pad - K) // stride + 1
    N = Ho * Wo
    M = B * N
    CKK = Cin * K * K
    xp = jnp.pad(x, ((0, 0), (0, 0), (pad, pad), (pad, pad)))
    taps = [xp[:, :, di:di + stride * (Ho - 1) + 1:stride,
               dj:dj + stride * (Wo - 1) + 1:stride]
            for di in range(K) for dj in range(K)]
    patches = jnp.stack(taps, axis=2)                       # (B, Cin, K*K, Ho, Wo)
    Xm = patches.reshape(B, CKK, N).transpose(1, 0, 2).reshape(CKK, M)
    Xm = Xm.astype(jnp.bfloat16)                            # bf16 MXU operands
    wf = w.reshape(Cout, CKK).astype(jnp.bfloat16)
    cb = (bias if bias is not None
          else jnp.zeros((Cout,), jnp.float32)).reshape(Cout, 1)
    TM = _pick_tile(M)
    MT = M // TM

    if bn is None:
        out = pl.pallas_call(
            functools.partial(_conv_mm_kernel, relu=relu),
            out_shape=jax.ShapeDtypeStruct((Cout, M), jnp.float32),
            grid=(MT,),
            in_specs=[pl.BlockSpec((CKK, TM), lambda i: (0, i)),
                      _rep((Cout, CKK)),
                      _rep((Cout, 1))],
            out_specs=pl.BlockSpec((Cout, TM), lambda i: (0, i)),
            compiler_params=pltpu.CompilerParams(
                dimension_semantics=("parallel",), vmem_limit_bytes=_VMEM_LIMIT),
        )(Xm, wf, cb)
    else:
        y, s1, s2 = pl.pallas_call(
            _conv_mm_stats_kernel,
            out_shape=[jax.ShapeDtypeStruct((Cout, M), jnp.float32),
                       jax.ShapeDtypeStruct((Cout, 1), jnp.float32),
                       jax.ShapeDtypeStruct((Cout, 1), jnp.float32)],
            grid=(MT,),
            in_specs=[pl.BlockSpec((CKK, TM), lambda i: (0, i)),
                      _rep((Cout, CKK)),
                      _rep((Cout, 1))],
            out_specs=[pl.BlockSpec((Cout, TM), lambda i: (0, i)),
                       _rep((Cout, 1)),
                       _rep((Cout, 1))],
            compiler_params=pltpu.CompilerParams(
                dimension_semantics=("arbitrary",), vmem_limit_bytes=_VMEM_LIMIT),
        )(Xm, wf, cb)
        g = bn[0].reshape(Cout, 1)
        bbeta = bn[1].reshape(Cout, 1)
        out = pl.pallas_call(
            functools.partial(_bn_relu_kernel, relu=relu, inv_n=1.0 / float(M)),
            out_shape=jax.ShapeDtypeStruct((Cout, M), jnp.float32),
            grid=(MT,),
            in_specs=[pl.BlockSpec((Cout, TM), lambda i: (0, i)),
                      _rep((Cout, 1)), _rep((Cout, 1)),
                      _rep((Cout, 1)), _rep((Cout, 1))],
            out_specs=pl.BlockSpec((Cout, TM), lambda i: (0, i)),
            compiler_params=pltpu.CompilerParams(
                dimension_semantics=("parallel",), vmem_limit_bytes=_VMEM_LIMIT),
        )(y, s1, s2, g, bbeta)
    return out.reshape(Cout, B, N).transpose(1, 0, 2).reshape(B, Cout, Ho, Wo)


def _pa(x, w, bias):
    # PA: x * sigmoid(depthwise 3x3 conv(x) + bias); taps formed in-kernel.
    B, C, H, W = x.shape
    xp = jnp.pad(x, ((0, 0), (0, 0), (1, 1), (1, 1)))       # (B, C, H+2, W+2)
    wt = w.reshape(C, 9).T.reshape(9, C, 1, 1)
    bb = bias.reshape(C, 1, 1)
    kern = functools.partial(_pa_kernel, H=H, W=W)
    return pl.pallas_call(
        kern,
        out_shape=jax.ShapeDtypeStruct((B, C, H, W), jnp.float32),
        grid=(B,),
        in_specs=[pl.BlockSpec((1, C, H + 2, W + 2), lambda b: (b, 0, 0, 0)),
                  _rep((9, C, 1, 1)),
                  _rep((C, 1, 1))],
        out_specs=pl.BlockSpec((1, C, H, W), lambda b: (b, 0, 0, 0)),
        compiler_params=pltpu.CompilerParams(
            dimension_semantics=("parallel",), vmem_limit_bytes=_VMEM_LIMIT),
    )(xp, wt, bb)


def _layernorm_ch(xT, g, b):
    # xT: (B, C, N); LayerNorm over the channel axis per token column.
    B, C, N = xT.shape
    return pl.pallas_call(
        _ln_ch_kernel,
        out_shape=jax.ShapeDtypeStruct((B, C, N), jnp.float32),
        grid=(B,),
        in_specs=[pl.BlockSpec((1, C, N), lambda b: (b, 0, 0)),
                  _rep((C, 1)), _rep((C, 1))],
        out_specs=pl.BlockSpec((1, C, N), lambda b: (b, 0, 0)),
        compiler_params=pltpu.CompilerParams(
            dimension_semantics=("parallel",), vmem_limit_bytes=_VMEM_LIMIT),
    )(xT, g.reshape(C, 1), b.reshape(C, 1))


def _block(xT, H, W, p, heads, sr):
    # One fused transformer Block on the channel-major (B, C, N) stream.
    B, C, N = xT.shape
    hd = C // heads
    scale = float(hd) ** -0.5
    hidden = p['w1'].shape[0]
    bf = jnp.bfloat16
    wq = p['wq'].astype(bf)            # (C, C)
    wkv = p['wkv'].astype(bf)          # (2C, C)
    wp = p['wproj'].astype(bf)         # (C, C)
    bp = p['bproj'].reshape(C, 1)
    l2g = p['ln2g'].reshape(C, 1)
    l2b = p['ln2b'].reshape(C, 1)
    w1 = p['w1'].astype(bf)            # (hidden, C)
    b1 = p['b1'].reshape(hidden, 1)
    w2 = p['w2'].astype(bf)            # (C, hidden)
    b2 = p['b2'].reshape(C, 1)
    cparams = pltpu.CompilerParams(dimension_semantics=("parallel",),
                                   vmem_limit_bytes=_VMEM_LIMIT)

    if sr == 1:
        l1g = p['ln1g'].reshape(C, 1)
        l1b = p['ln1b'].reshape(C, 1)
        kern = functools.partial(_block_sr1_kernel, heads=heads, hd=hd, scale=scale)
        return pl.pallas_call(
            kern,
            out_shape=jax.ShapeDtypeStruct((B, C, N), jnp.float32),
            grid=(B,),
            in_specs=[pl.BlockSpec((1, C, N), lambda b: (b, 0, 0)),
                      _rep((C, C)), _rep((2 * C, C)), _rep((C, C)), _rep((C, 1)),
                      _rep((C, 1)), _rep((C, 1)), _rep((C, 1)), _rep((C, 1)),
                      _rep((hidden, C)), _rep((hidden, 1)),
                      _rep((C, hidden)), _rep((C, 1))],
            out_specs=pl.BlockSpec((1, C, N), lambda b: (b, 0, 0)),
            compiler_params=cparams,
        )(xT, wq, wkv, wp, bp, l1g, l1b, l2g, l2b, w1, b1, w2, b2)

    # sr > 1: LN1 as a small channel-LN kernel (its output feeds the strided
    # depthwise conv); taps extracted in glue; everything else fused in-kernel.
    y = _layernorm_ch(xT, p['ln1g'], p['ln1b'])            # (B, C, N)
    y_img = y.reshape(B, C, H, W)
    K = sr + 1
    pad = sr // 2
    Hk = (H + 2 * pad - K) // sr + 1
    Wk = (W + 2 * pad - K) // sr + 1
    Nk = Hk * Wk
    yp = jnp.pad(y_img, ((0, 0), (0, 0), (pad, pad), (pad, pad)))
    # TODO(synk): build these strided taps in-kernel from the resident y tile.
    taps = jnp.stack(
        [yp[:, :, di:di + sr * (Hk - 1) + 1:sr, dj:dj + sr * (Wk - 1) + 1:sr]
         for di in range(K) for dj in range(K)], axis=1)    # (B, K*K, C, Hk, Wk)
    taps = taps.reshape(B, K * K, C, Nk)
    wsr = p['wsr'].reshape(C, K * K).T.reshape(K * K, C, 1)
    bsr = p['bsr'].reshape(C, 1)
    sg = p['srg'].reshape(C, 1)
    sb = p['srb'].reshape(C, 1)
    kern = functools.partial(_block_srn_kernel, heads=heads, hd=hd, scale=scale,
                             kk=K * K)
    return pl.pallas_call(
        kern,
        out_shape=jax.ShapeDtypeStruct((B, C, N), jnp.float32),
        grid=(B,),
        in_specs=[pl.BlockSpec((1, C, N), lambda b: (b, 0, 0)),
                  pl.BlockSpec((1, C, N), lambda b: (b, 0, 0)),
                  pl.BlockSpec((1, K * K, C, Nk), lambda b: (b, 0, 0, 0)),
                  _rep((K * K, C, 1)), _rep((C, 1)), _rep((C, 1)), _rep((C, 1)),
                  _rep((C, C)), _rep((2 * C, C)), _rep((C, C)), _rep((C, 1)),
                  _rep((C, 1)), _rep((C, 1)),
                  _rep((hidden, C)), _rep((hidden, 1)),
                  _rep((C, hidden)), _rep((C, 1))],
        out_specs=pl.BlockSpec((1, C, N), lambda b: (b, 0, 0)),
        compiler_params=cparams,
    )(xT, y, taps, wsr, bsr, sg, sb, wq, wkv, wp, bp, l2g, l2b, w1, b1, w2, b2)


# --------------------------------------------------------------- full forward

def rest_forward_pallas(x, P, cfg):
    dims = cfg['embed_dims']
    heads_l = cfg['num_heads']
    srs = cfg['sr_ratios']
    s = P['stem']
    h = _conv_bn_act(x, s['w1'], None, 2, 1, bn=(s['g1'], s['b1']), relu=True)
    h = _conv_bn_act(h, s['w2'], None, 1, 1, bn=(s['g2'], s['b2']), relu=True)
    h = _conv_bn_act(h, s['w3'], None, 2, 1, bn=None, relu=False)
    h = _pa(h, s['pa_w'], s['pa_b'])
    B, C, H, W = h.shape
    xT = h.reshape(B, C, H * W)                              # channel-major tokens
    for p in P['stage1']:
        xT = _block(xT, H, W, p, heads_l[0], srs[0])
    x3 = None
    for si in (1, 2, 3):
        img = xT.reshape(B, dims[si - 1], H, W)
        if si == 3:
            x3 = img
        pe = P['pe%d' % (si + 1)]
        himg = _conv_bn_act(img, pe['w'], pe['b'], 2, 1,
                            bn=(pe['g'], pe['bb']), relu=False)
        himg = _pa(himg, pe['pa_w'], pe['pa_b'])
        H, W = H // 2, W // 2
        C = dims[si]
        xT = himg.reshape(B, C, H * W)
        for p in P['stage%d' % (si + 1)]:
            xT = _block(xT, H, W, p, heads_l[si], srs[si])
    xT = _layernorm_ch(xT, P['norm_g'], P['norm_b'])
    x4 = xT.reshape(B, dims[3], H, W)
    return x3, x4


# ------------------------------------------------------------------ parameters

def make_params(key, cfg):
    dims = cfg['embed_dims']
    srs = cfg['sr_ratios']
    depths = cfg['depths']
    mlps = cfg['mlp_ratios']
    keys = iter(jax.random.split(key, 512))

    def nrm(shape, s=0.05):
        return s * jax.random.normal(next(keys), shape, jnp.float32)

    def near_one(shape):
        return 1.0 + 0.1 * jax.random.normal(next(keys), shape, jnp.float32)

    P = {}
    hid0 = dims[0] // 2
    P['stem'] = dict(
        w1=nrm((hid0, 3, 3, 3)), g1=near_one((hid0,)), b1=nrm((hid0,)),
        w2=nrm((hid0, hid0, 3, 3)), g2=near_one((hid0,)), b2=nrm((hid0,)),
        w3=nrm((dims[0], hid0, 3, 3)),
        pa_w=nrm((dims[0], 1, 3, 3)), pa_b=nrm((dims[0],)),
    )
    for i in (1, 2, 3):
        P['pe%d' % (i + 1)] = dict(
            w=nrm((dims[i], dims[i - 1], 3, 3)), b=nrm((dims[i],)),
            g=near_one((dims[i],)), bb=nrm((dims[i],)),
            pa_w=nrm((dims[i], 1, 3, 3)), pa_b=nrm((dims[i],)),
        )

    def block_params(dim, sr, mlp_ratio):
        hid = dim * mlp_ratio
        p = dict(
            ln1g=near_one((dim,)), ln1b=nrm((dim,)),
            wq=nrm((dim, dim)), wkv=nrm((2 * dim, dim)),
            wproj=nrm((dim, dim)), bproj=nrm((dim,)),
            ln2g=near_one((dim,)), ln2b=nrm((dim,)),
            w1=nrm((hid, dim)), b1=nrm((hid,)),
            w2=nrm((dim, hid)), b2=nrm((dim,)),
        )
        if sr > 1:
            K = sr + 1
            p.update(wsr=nrm((dim, 1, K, K)), bsr=nrm((dim,)),
                     srg=near_one((dim,)), srb=nrm((dim,)))
        return p

    for si in range(4):
        P['stage%d' % (si + 1)] = [block_params(dims[si], srs[si], mlps[si])
                                   for _ in range(depths[si])]
    P['norm_g'] = near_one((dims[3],))
    P['norm_b'] = nrm((dims[3],))
    return P


# --------------------------------------------------- pure-JAX reference (check)

def rest_forward_reference(x, P, cfg):
    dims = cfg['embed_dims']
    heads_l = cfg['num_heads']
    srs = cfg['sr_ratios']

    def conv2d(x, w, b, stride, pad, groups=1):
        y = lax.conv_general_dilated(x, w, (stride, stride), [(pad, pad), (pad, pad)],
                                     dimension_numbers=('NCHW', 'OIHW', 'NCHW'),
                                     feature_group_count=groups)
        if b is not None:
            y = y + b.reshape(1, -1, 1, 1)
        return y

    def bn(x, g, b):
        mu = jnp.mean(x, axis=(0, 2, 3), keepdims=True)
        var = jnp.mean((x - mu) ** 2, axis=(0, 2, 3), keepdims=True)
        return (x - mu) / jnp.sqrt(var + EPS_BN) * g.reshape(1, -1, 1, 1) + b.reshape(1, -1, 1, 1)

    def ln(x, g, b):
        mu = jnp.mean(x, axis=-1, keepdims=True)
        var = jnp.mean((x - mu) ** 2, axis=-1, keepdims=True)
        return (x - mu) / jnp.sqrt(var + EPS_LN) * g + b

    def pa(x, w, b):
        return x * jax.nn.sigmoid(conv2d(x, w, b, 1, 1, groups=x.shape[1]))

    def attention(x, H, W, p, nh, sr):
        B, N, C = x.shape
        hd = C // nh
        scale = hd ** -0.5
        q = (x @ p['wq'].T).reshape(B, N, nh, hd).transpose(0, 2, 1, 3)
        if sr > 1:
            xi = x.transpose(0, 2, 1).reshape(B, C, H, W)
            xi = conv2d(xi, p['wsr'], p['bsr'], sr, sr // 2, groups=C)
            xs = xi.reshape(B, C, -1).transpose(0, 2, 1)
            xs = ln(xs, p['srg'], p['srb'])
        else:
            xs = x
        Nk = xs.shape[1]
        kv = (xs @ p['wkv'].T).reshape(B, Nk, 2, nh, hd).transpose(2, 0, 3, 1, 4)
        k, v = kv[0], kv[1]
        a = jnp.einsum('bhnd,bhmd->bhnm', q, k) * scale
        a = jax.nn.softmax(a, axis=-1)
        o = jnp.einsum('bhnm,bhmd->bhnd', a, v).transpose(0, 2, 1, 3).reshape(B, N, C)
        return o @ p['wproj'].T + p['bproj']

    def block(x, H, W, p, nh, sr):
        x = x + attention(ln(x, p['ln1g'], p['ln1b']), H, W, p, nh, sr)
        z = ln(x, p['ln2g'], p['ln2b'])
        z = jax.nn.gelu(z @ p['w1'].T + p['b1'], approximate=True) @ p['w2'].T + p['b2']
        return x + z

    s = P['stem']
    h = jax.nn.relu(bn(conv2d(x, s['w1'], None, 2, 1), s['g1'], s['b1']))
    h = jax.nn.relu(bn(conv2d(h, s['w2'], None, 1, 1), s['g2'], s['b2']))
    h = conv2d(h, s['w3'], None, 2, 1)
    h = pa(h, s['pa_w'], s['pa_b'])
    B, C, H, W = h.shape
    xt = h.reshape(B, C, H * W).transpose(0, 2, 1)
    for p in P['stage1']:
        xt = block(xt, H, W, p, heads_l[0], srs[0])
    x3 = None
    for si in (1, 2, 3):
        img = xt.transpose(0, 2, 1).reshape(B, dims[si - 1], H, W)
        if si == 3:
            x3 = img
        pe = P['pe%d' % (si + 1)]
        himg = bn(conv2d(img, pe['w'], pe['b'], 2, 1), pe['g'], pe['bb'])
        himg = pa(himg, pe['pa_w'], pe['pa_b'])
        H, W = H // 2, W // 2
        C = dims[si]
        xt = himg.reshape(B, C, H * W).transpose(0, 2, 1)
        for p in P['stage%d' % (si + 1)]:
            xt = block(xt, H, W, p, heads_l[si], srs[si])
    xt = ln(xt, P['norm_g'], P['norm_b'])
    x4 = xt.transpose(0, 2, 1).reshape(B, dims[3], H, W)
    return x3, x4


# --------------------------------------------------------------------- main ---

if __name__ == "__main__":
    cfg = dict(embed_dims=[32, 64, 128, 256], num_heads=[1, 2, 4, 8],
               mlp_ratios=[4, 4, 4, 4], depths=[1, 1, 1, 1], sr_ratios=[8, 4, 2, 1])
    key = jax.random.PRNGKey(0)
    kp, kx = jax.random.split(key)
    P = make_params(kp, cfg)
    x = jax.random.normal(kx, (2, 3, 64, 64), jnp.float32)

    x3, x4 = rest_forward_pallas(x, P, cfg)
    jax.block_until_ready((x3, x4))

    r3, r4 = rest_forward_reference(x, P, cfg)
    np.testing.assert_allclose(np.asarray(x3), np.asarray(r3), rtol=5e-2, atol=5e-2)
    np.testing.assert_allclose(np.asarray(x4), np.asarray(r4), rtol=5e-2, atol=5e-2)
    print("KERNEL_OK")
</pallas_src>

<mosaic_0001>
module attributes {stable_mosaic.version = 11 : i64} {
  func.func @_conv_mm_stats_kernel(%arg0: i32, %arg1: memref<27x1024xbf16, #tpu.memory_space<vmem>>, %arg2: memref<16x27xbf16, #tpu.memory_space<vmem>>, %arg3: memref<16x1xf32, #tpu.memory_space<vmem>>, %arg4: memref<16x1024xf32, #tpu.memory_space<vmem>>, %arg5: memref<16x1xf32, #tpu.memory_space<vmem>>, %arg6: memref<16x1xf32, #tpu.memory_space<vmem>>) attributes {dimension_semantics = [#tpu.dimension_semantics<arbitrary>], iteration_bounds = array<i64: 2>, scalar_prefetch = 0 : i64, scratch_operands = 0 : i64, tpu.core_type = #tpu.core_type<tc>, window_params = [{transform_indices = @transform_0, window_bounds = array<i64: 27, 1024>}, {pipeline_mode = #tpu.pipeline_mode<synchronous>, transform_indices = @transform_1, window_bounds = array<i64: 16, 27>}, {pipeline_mode = #tpu.pipeline_mode<synchronous>, transform_indices = @transform_2, window_bounds = array<i64: 16, 1>}, {transform_indices = @transform_3, window_bounds = array<i64: 16, 1024>}, {pipeline_mode = #tpu.pipeline_mode<synchronous>, transform_indices = @transform_4, window_bounds = array<i64: 16, 1>}, {pipeline_mode = #tpu.pipeline_mode<synchronous>, transform_indices = @transform_5, window_bounds = array<i64: 16, 1>}]} {
    %c0 = arith.constant 0 : index
    %c0_0 = arith.constant 0 : index
    %0 = vector.load %arg2[%c0, %c0_0] : memref<16x27xbf16, #tpu.memory_space<vmem>>, vector<16x27xbf16>
    %c0_1 = arith.constant 0 : index
    %c0_2 = arith.constant 0 : index
    %1 = vector.load %arg1[%c0_1, %c0_2] : memref<27x1024xbf16, #tpu.memory_space<vmem>>, vector<27x1024xbf16>
    %cst = arith.constant dense<0.000000e+00> : vector<16x1024xf32>
    %2 = tpu.matmul %0, %1, %cst {dimension_numbers = #tpu.dot_dimension_numbers<[1], [0], [0], [1], [0, 0, 1, 1], [], []>} : vector<16x27xbf16>, vector<27x1024xbf16>, vector<16x1024xf32> -> vector<16x1024xf32>
    %c0_3 = arith.constant 0 : index
    %c0_4 = arith.constant 0 : index
    %3 = vector.load %arg3[%c0_3, %c0_4] : memref<16x1xf32, #tpu.memory_space<vmem>>, vector<16x1xf32>
    %4 = vector.broadcast %3 : vector<16x1xf32> to vector<16x1024xf32>
    %5 = arith.addf %2, %4 : vector<16x1024xf32>
    %c0_5 = arith.constant 0 : index
    %c0_6 = arith.constant 0 : index
    %6 = vector.load %arg4[%c0_5, %c0_6] : memref<16x1024xf32, #tpu.memory_space<vmem>>, vector<16x1024xf32>
    tpu.vector_store %arg4[%c0_5, %c0_6], %5 {strides = array<i32>} : memref<16x1024xf32, #tpu.memory_space<vmem>>, vector<16x1024xf32>,
    %c0_i32 = arith.constant 0 : i32
    %7 = arith.cmpi eq, %arg0, %c0_i32 : i32
    %8 = arith.extui %7 : i1 to i32
    %c0_i32_7 = arith.constant 0 : i32
    %9 = arith.cmpi ne, %8, %c0_i32_7 : i32
    scf.if %9 {
      %cst_18 = arith.constant 0.000000e+00 : f32
      %21 = vector.broadcast %cst_18 : f32 to vector<16x1xf32>
      %c0_19 = arith.constant 0 : index
      %c0_20 = arith.constant 0 : index
      %22 = vector.load %arg5[%c0_19, %c0_20] : memref<16x1xf32, #tpu.memory_space<vmem>>, vector<16x1xf32>
      tpu.vector_store %arg5[%c0_19, %c0_20], %21 {strides = array<i32>} : memref<16x1xf32, #tpu.memory_space<vmem>>, vector<16x1xf32>,
      %cst_21 = arith.constant 0.000000e+00 : f32
      %23 = vector.broadcast %cst_21 : f32 to vector<16x1xf32>
      %c0_22 = arith.constant 0 : index
      %c0_23 = arith.constant 0 : index
      %24 = vector.load %arg6[%c0_22, %c0_23] : memref<16x1xf32, #tpu.memory_space<vmem>>, vector<16x1xf32>
      tpu.vector_store %arg6[%c0_22, %c0_23], %23 {strides = array<i32>} : memref<16x1xf32, #tpu.memory_space<vmem>>, vector<16x1xf32>,
    } else {
    }
    %c0_8 = arith.constant 0 : index
    %c0_9 = arith.constant 0 : index
    %10 = vector.load %arg5[%c0_8, %c0_9] : memref<16x1xf32, #tpu.memory_space<vmem>>, vector<16x1xf32>
    %cst_10 = arith.constant dense<0.000000e+00> : vector<16xf32>
    %11 = vector.multi_reduction <add>, %5, %cst_10 [1] : vector<16x1024xf32> to vector<16xf32>
    %12 = vector.shape_cast %11 : vector<16xf32> to vector<16x1xf32>
    %13 = arith.addf %10, %12 : vector<16x1xf32>
    %c0_11 = arith.constant 0 : index
    %c0_12 = arith.constant 0 : index
    %14 = vector.load %arg5[%c0_11, %c0_12] : memref<16x1xf32, #tpu.memory_space<vmem>>, vector<16x1xf32>
    tpu.vector_store %arg5[%c0_11, %c0_12], %13 {strides = array<i32>} : memref<16x1xf32, #tpu.memory_space<vmem>>, vector<16x1xf32>,
    %c0_13 = arith.constant 0 : index
    %c0_14 = arith.constant 0 : index
    %15 = vector.load %arg6[%c0_13, %c0_14] : memref<16x1xf32, #tpu.memory_space<vmem>>, vector<16x1xf32>
    %16 = arith.mulf %5, %5 : vector<16x1024xf32>
    %cst_15 = arith.constant dense<0.000000e+00> : vector<16xf32>
    %17 = vector.multi_reduction <add>, %16, %cst_15 [1] : vector<16x1024xf32> to vector<16xf32>
    %18 = vector.shape_cast %17 : vector<16xf32> to vector<16x1xf32>
    %19 = arith.addf %15, %18 : vector<16x1xf32>
    %c0_16 = arith.constant 0 : index
    %c0_17 = arith.constant 0 : index
    %20 = vector.load %arg6[%c0_16, %c0_17] : memref<16x1xf32, #tpu.memory_space<vmem>>, vector<16x1xf32>
    tpu.vector_store %arg6[%c0_16, %c0_17], %19 {strides = array<i32>} : memref<16x1xf32, #tpu.memory_space<vmem>>, vector<16x1xf32>,
    return
  }
  func.func @transform_0(%arg0: i32) -> (i32, i32) {
    %c0_i32 = arith.constant 0 : i32
    %c0_i32_0 = arith.constant 0 : i32
    return %c0_i32, %arg0 : i32, i32
  }
  func.func @transform_1(%arg0: i32) -> (i32, i32) {
    %c0_i32 = arith.constant 0 : i32
    %c0_i32_0 = arith.constant 0 : i32
    %c0_i32_1 = arith.constant 0 : i32
    return %c0_i32, %c0_i32_0 : i32, i32
  }
  func.func @transform_2(%arg0: i32) -> (i32, i32) {
    %c0_i32 = arith.constant 0 : i32
    %c0_i32_0 = arith.constant 0 : i32
    %c0_i32_1 = arith.constant 0 : i32
    return %c0_i32, %c0_i32_0 : i32, i32
  }
  func.func @transform_3(%arg0: i32) -> (i32, i32) {
    %c0_i32 = arith.constant 0 : i32
    %c0_i32_0 = arith.constant 0 : i32
    return %c0_i32, %arg0 : i32, i32
  }
  func.func @transform_4(%arg0: i32) -> (i32, i32) {
    %c0_i32 = arith.constant 0 : i32
    %c0_i32_0 = arith.constant 0 : i32
    %c0_i32_1 = arith.constant 0 : i32
    return %c0_i32, %c0_i32_0 : i32, i32
  }
  func.func @transform_5(%arg0: i32) -> (i32, i32) {
    %c0_i32 = arith.constant 0 : i32
    %c0_i32_0 = arith.constant 0 : i32
    %c0_i32_1 = arith.constant 0 : i32
    return %c0_i32, %c0_i32_0 : i32, i32
  }
}

</mosaic_0001>

<llo_original>
// kernel: tpu_custom_call.1
$region0: #{tpu_custom_call.1}
  #allocation0 [shape = 'u32[]', space=smem, size = 0x4, offset = 0x4, fixed_abs, tag = 'smem constant byte address 0x4 - core index']
  #allocation1 [shape = 'u32[144,128]{1,0:T(1,128)}', space=vmem, size = 0x12000, scoped, tag = 'internal scratch']
  %s0 = inlined_call_operand.hbm [shape: bf16[27,2048], index: 0, kind: input, shape index: {}]
  %s1 = inlined_call_operand.vmem [shape: bf16[16,27], index: 1, kind: input, shape index: {}]
  %s2 = inlined_call_operand.vmem [shape: f32[16,1], index: 2, kind: input, shape index: {}]
  %s3 = inlined_call_operand.hbm [shape: f32[16,2048], index: 3, kind: output, shape index: {0}]
  %s4 = inlined_call_operand.vmem [shape: f32[16,1], index: 4, kind: output, shape index: {1}]
  %s5 = inlined_call_operand.vmem [shape: f32[16,1], index: 5, kind: output, shape index: {2}]
  %6 = xla_tuple %s3, %s4, %s5
  %s7 = sld [smem:[#allocation0]]
  $region69: #{tpu_custom_call.1} parent=0
    _
  %s9 = ssub.s32 1, %s7
  %s10 = scalar_select 0, %s9, %s7
  $region1: #{tpu_custom_call.1} parent=0
    #allocation2 [shape = 'u8[131072]{0}', space=vmem, size = 0x20000, scoped, tag = 'input window, operand 0']
    #allocation3 [shape = 's32[2]{0}', space=sflag, size = 0x8, scoped, tag = 'scoped memory for tpu_custom_call.1']
    #allocation4 [shape = 's32[2]{0}', space=sflag, size = 0x8, scoped, tag = 'scoped memory for tpu_custom_call.1']
    #allocation5 [shape = 'u8[131072]{0}', space=vmem, size = 0x20000, scoped, tag = 'output window, operand 0']
    %11 = vsyncpa [#allocation3], 0
    %s12 = scalar_lea.sflag [#allocation3], 1
    %13 = vsyncpa %s12, 0
    %14 = vsyncpa [#allocation4], 0
    %s15 = scalar_lea.sflag [#allocation4], 1
    %16 = vsyncpa %s15, 0
    loop: start=0, step=1, limit=4
    $region2: #{tpu_custom_call.1} parent=1 // loop_pre_header
      _
    $region3: #{tpu_custom_call.1} parent=1 // loop_header
      %s18 = sphi 0, %s22
      %p19 = scmp.ge.s32.totalorder %s18, 4
      %s28 = sphi 0, %s30
      %s31 = sphi 0, %s28
      %s32 = sphi 0, %s31
      %s48 = sphi 0, %s32
      %s52 = sphi 0, %s52
      %s54 = sphi 0, %s52
      %s55 = sphi 0, %s54
      %s69 = sphi 0, %s55
      %s73 = sphi 0, %s73
      %s75 = sphi 0, %s73
      %s76 = sphi 0, %s75
      %s90 = sphi 0, %s76
      %s96 = sphi 0, %s98
      %s99 = sphi 0, %s96
      %s100 = sphi 0, %s99
      %s116 = sphi 0, %s100
      %s120 = sphi 0, %s120
      %s122 = sphi 0, %s120
      %s123 = sphi 0, %s122
      %s137 = sphi 0, %s123
      %s141 = sphi 0, %s141
      %s143 = sphi 0, %s141
      %s144 = sphi 0, %s143
      %s158 = sphi 0, %s144
    $region4: #{tpu_custom_call.1} parent=1 // loop_header_branch
      %21 = sbr.rel (%p19) target = $region8
    $region5: #{tpu_custom_call.1} parent=1 // loop_body
      %s23 = ssub.s32 %s18, 1
      %s24 = ssub.s32 %s18, 2
      %s25 = sadd.s32 %s18, 1
      %s26 = ssub.s32 %s18, %s25
      %p27 = scmp.eq.s32.totalorder %s26, 0
      %s29 = sadd.s32 %s28, 1
      %s30 = scalar_select %p27, %s28, %s29
      %p33 = pneg %p27
      %p34 = scmp.eq.s32.totalorder %s18, 1
      %p35 = por %p33, %p34
      %p36 = scmp.ne.s32.totalorder %s28, %s31
      %p37 = scmp.eq.s32.totalorder %s18, 0
      %p38 = por %p36, %p37
      %p39 = scmp.ne.s32.totalorder %s28, %s31
      %p40 = scmp.eq.s32.totalorder %s23, 1
      %p41 = por %p39, %p40
      %p42 = scmp.ne.s32.totalorder %s31, %s32
      %p43 = scmp.eq.s32.totalorder %s23, 0
      %p44 = por %p42, %p43
      %p45 = scmp.ne.s32.totalorder %s31, %s32
      %p46 = scmp.eq.s32.totalorder %s24, 1
      %p47 = por %p45, %p46
      %p49 = scmp.ne.s32.totalorder %s32, %s48
      %p50 = scmp.eq.s32.totalorder %s24, 0
      %p51 = por %p49, %p50
      %s53 = sadd.s32 %s52, 1
      %p56 = scmp.eq.s32.totalorder %s18, 1
      %p57 = scmp.ne.s32.totalorder %s52, %s54
      %p58 = scmp.eq.s32.totalorder %s18, 0
      %p59 = por %p57, %p58
      %p60 = scmp.ne.s32.totalorder %s52, %s54
      %p61 = scmp.eq.s32.totalorder %s23, 1
      %p62 = por %p60, %p61
      %p63 = scmp.ne.s32.totalorder %s54, %s55
      %p64 = scmp.eq.s32.totalorder %s23, 0
      %p65 = por %p63, %p64
      %p66 = scmp.ne.s32.totalorder %s54, %s55
      %p67 = scmp.eq.s32.totalorder %s24, 1
      %p68 = por %p66, %p67
      %p70 = scmp.ne.s32.totalorder %s55, %s69
      %p71 = scmp.eq.s32.totalorder %s24, 0
      %p72 = por %p70, %p71
      %s74 = sadd.s32 %s73, 1
      %p77 = scmp.eq.s32.totalorder %s18, 1
      %p78 = scmp.ne.s32.totalorder %s73, %s75
      %p79 = scmp.eq.s32.totalorder %s18, 0
      %p80 = por %p78, %p79
      %p81 = scmp.ne.s32.totalorder %s73, %s75
      %p82 = scmp.eq.s32.totalorder %s23, 1
      %p83 = por %p81, %p82
      %p84 = scmp.ne.s32.totalorder %s75, %s76
      %p85 = scmp.eq.s32.totalorder %s23, 0
      %p86 = por %p84, %p85
      %p87 = scmp.ne.s32.totalorder %s75, %s76
      %p88 = scmp.eq.s32.totalorder %s24, 1
      %p89 = por %p87, %p88
      %p91 = scmp.ne.s32.totalorder %s76, %s90
      %p92 = scmp.eq.s32.totalorder %s24, 0
      %p93 = por %p91, %p92
      %s94 = ssub.s32 %s18, %s25
      %p95 = scmp.eq.s32.totalorder %s94, 0
      %s97 = sadd.s32 %s96, 1
      %s98 = scalar_select %p95, %s96, %s97
      %p101 = pneg %p95
      %p102 = scmp.eq.s32.totalorder %s18, 1
      %p103 = por %p101, %p102
      %p104 = scmp.ne.s32.totalorder %s96, %s99
      %p105 = scmp.eq.s32.totalorder %s18, 0
      %p106 = por %p104, %p105
      %p107 = scmp.ne.s32.totalorder %s96, %s99
      %p108 = scmp.eq.s32.totalorder %s23, 1
      %p109 = por %p107, %p108
      %p110 = scmp.ne.s32.totalorder %s99, %s100
      %p111 = scmp.eq.s32.totalorder %s23, 0
      %p112 = por %p110, %p111
      %p113 = scmp.ne.s32.totalorder %s99, %s100
      %p114 = scmp.eq.s32.totalorder %s24, 1
      %p115 = por %p113, %p114
      %p117 = scmp.ne.s32.totalorder %s100, %s116
      %p118 = scmp.eq.s32.totalorder %s24, 0
      %p119 = por %p117, %p118
      %s121 = sadd.s32 %s120, 1
      %p124 = scmp.eq.s32.totalorder %s18, 1
      %p125 = scmp.ne.s32.totalorder %s120, %s122
      %p126 = scmp.eq.s32.totalorder %s18, 0
      %p127 = por %p125, %p126
      %p128 = scmp.ne.s32.totalorder %s120, %s122
      %p129 = scmp.eq.s32.totalorder %s23, 1
      %p130 = por %p128, %p129
      %p131 = scmp.ne.s32.totalorder %s122, %s123
      %p132 = scmp.eq.s32.totalorder %s23, 0
      %p133 = por %p131, %p132
      %p134 = scmp.ne.s32.totalorder %s122, %s123
      %p135 = scmp.eq.s32.totalorder %s24, 1
      %p136 = por %p134, %p135
      %p138 = scmp.ne.s32.totalorder %s123, %s137
      %p139 = scmp.eq.s32.totalorder %s24, 0
      %p140 = por %p138, %p139
      %s142 = sadd.s32 %s141, 1
      %p145 = scmp.eq.s32.totalorder %s18, 1
      %p146 = scmp.ne.s32.totalorder %s141, %s143
      %p147 = scmp.eq.s32.totalorder %s18, 0
      %p148 = por %p146, %p147
      %p149 = scmp.ne.s32.totalorder %s141, %s143
      %p150 = scmp.eq.s32.totalorder %s23, 1
      %p151 = por %p149, %p150
      %p152 = scmp.ne.s32.totalorder %s143, %s144
      %p153 = scmp.eq.s32.totalorder %s23, 0
      %p154 = por %p152, %p153
      %p155 = scmp.ne.s32.totalorder %s143, %s144
      %p156 = scmp.eq.s32.totalorder %s24, 1
      %p157 = por %p155, %p156
      %p159 = scmp.ne.s32.totalorder %s144, %s158
      %p160 = scmp.eq.s32.totalorder %s24, 0
      %p161 = por %p159, %p160
      %p162 = scmp.le.s32.totalorder 1, %s18
      %p163 = scmp.lt.s32.totalorder %s18, 3
      %p164 = pnand %p162, %p163
      %p165 = pneg %p164
      // Predicated region
      $region9: #{tpu_custom_call.1} parent=5 // pred_check
        _
      $region10: #{tpu_custom_call.1} parent=5 // pred_check_branch
        %167 = sbr.rel (%p164) target = $region12
      $region11: #{tpu_custom_call.1} parent=5 // pred_region
        %s168 = ssub.s32 %s18, 1
        // Predicated region
        $region13: #{tpu_custom_call.1} parent=11 // pred_check
          %p169 = pneg %p65
        $region14: #{tpu_custom_call.1} parent=11 // pred_check_branch
          %171 = sbr.rel (%p169) target = $region16
        $region15: #{tpu_custom_call.1} parent=11 // pred_region
          _
        $region16: #{tpu_custom_call.1} parent=11 // pred_fallthru
          _
        // Predicated region
        $region17: #{tpu_custom_call.1} parent=11 // pred_check
          %p172 = pneg %p86
        $region18: #{tpu_custom_call.1} parent=11 // pred_check_branch
          %174 = sbr.rel (%p172) target = $region20
        $region19: #{tpu_custom_call.1} parent=11 // pred_region
          _
        $region20: #{tpu_custom_call.1} parent=11 // pred_fallthru
          _
      $region12: #{tpu_custom_call.1} parent=5 // pred_fallthru
        _
      %p175 = scmp.lt.s32.totalorder %s18, 2
      // Predicated region
      $region21: #{tpu_custom_call.1} parent=5 // pred_check
        %p176 = pneg %p175
      $region22: #{tpu_custom_call.1} parent=5 // pred_check_branch
        %178 = sbr.rel (%p176) target = $region24
      $region23: #{tpu_custom_call.1} parent=5 // pred_region
        // Predicated region
        $region25: #{tpu_custom_call.1} parent=23 // pred_check
          %p179 = pneg %p38
        $region26: #{tpu_custom_call.1} parent=23 // pred_check_branch
          %181 = sbr.rel (%p179) target = $region28
        $region27: #{tpu_custom_call.1} parent=23 // pred_region
          %s182 = sand.u32 %s28, 1
          %s183 = scalar_lea.sflag [#allocation3], %s182
          %s184 = sand.u32 %s28, 1
          %s185 = smul.addr %s184, 128
          %s186 = scalar_lea.vmem [#allocation2], %s185
          %s187 = smul.u32 8, %s18
          %s189 = ssub.s32 2048, 2048
          %190 = vsyncadd %s183, %s189
          %s191 = smul.addr %s187, 64
          %s192 = scalar_lea.hbm %s0, %s191
          %s193 = sshll.u32 %s186, 4
          %s194 = int_to_ptr.vmem [resolvable:$true] %s193
          %199 = dma.hbm_to_vmem [thread:$0]  %s192, 2048, %s194, %s183, 1024, 512, 32
        $region28: #{tpu_custom_call.1} parent=23 // pred_fallthru
          _
      $region24: #{tpu_custom_call.1} parent=5 // pred_fallthru
        _
      %p200 = scmp.le.s32.totalorder 1, %s18
      %p201 = scmp.lt.s32.totalorder %s18, 3
      %p202 = pnand %p200, %p201
      %p203 = pneg %p202
      // Predicated region
      $region29: #{tpu_custom_call.1} parent=5 // pred_check
        _
      $region30: #{tpu_custom_call.1} parent=5 // pred_check_branch
        %205 = sbr.rel (%p202) target = $region32
      $region31: #{tpu_custom_call.1} parent=5 // pred_region
        %s206 = ssub.s32 %s18, 1
        %s207 = sand.u32 %s31, 1
        %s208 = scalar_lea.sflag [#allocation3], %s207
        %s209 = sand.u32 %s31, 1
        %s210 = smul.addr %s209, 128
        %s211 = scalar_lea.vmem [#allocation2], %s210
        // Predicated region
        $region33: #{tpu_custom_call.1} parent=31 // pred_check
          %p212 = pneg %p44
        $region34: #{tpu_custom_call.1} parent=31 // pred_check_branch
          %214 = sbr.rel (%p212) target = $region36
        $region35: #{tpu_custom_call.1} parent=31 // pred_region
          %215 = dma.done %s208, 2048
        $region36: #{tpu_custom_call.1} parent=31 // pred_fallthru
          _
        %s216 = sand.u32 %s31, 1
        %s217 = scalar_lea.sflag [#allocation3], %s216
        %s218 = sand.u32 %s31, 1
        %s219 = smul.addr %s218, 128
        %s220 = scalar_lea.vmem [#allocation2], %s219
        %p221 = pneg %p44
        %p222 = pneg %p41
        %p223 = pneg %p65
        %p224 = pneg %p62
        %p225 = pneg %p86
        %p226 = pneg %p83
        %p227 = pneg %p112
        %p228 = pneg %p109
        %s229 = sand.u32 %s99, 1
        %s230 = scalar_lea.sflag [#allocation4], %s229
        %s231 = sand.u32 %s99, 1
        %s232 = smul.addr %s231, 128
        %s233 = scalar_lea.vmem [#allocation5], %s232
        %p234 = pneg %p133
        %p235 = pneg %p130
        %p236 = pneg %p154
        %p237 = pneg %p151
        %s238 = smul.u32 8, %s23
        %s239 = smul.u32 8, %s23
        %v241 = vld [vmem:[%s1] sm:$0xf]
        %v242 = vld [vmem:[%s1 + $0x4] sm:$0xf]
        %v243 = vld [vmem:[%s211] sm:$0xff]
        %v244 = vld [vmem:[%s211 + $0x8] sm:$0xff]
        %v245 = vld [vmem:[%s211 + $0x10] sm:$0xff]
        %v246 = vld [vmem:[%s211 + $0x18] sm:$0xff]
        %v247 = vld [vmem:[%s211 + $0x20] sm:$0xff]
        %v248 = vld [vmem:[%s211 + $0x28] sm:$0xff]
        %v249 = vld [vmem:[%s211 + $0x30] sm:$0xff]
        %v250 = vld [vmem:[%s211 + $0x38] sm:$0xff]
        %v251 = vld [vmem:[%s211 + $0x40] sm:$0xff]
        %v252 = vld [vmem:[%s211 + $0x48] sm:$0xff]
        %v253 = vld [vmem:[%s211 + $0x50] sm:$0xff]
        %v254 = vld [vmem:[%s211 + $0x58] sm:$0xff]
        %v255 = vld [vmem:[%s211 + $0x60] sm:$0x33]
        %v256 = vld [vmem:[%s211 + $0x68] sm:$0x33]
        %v257 = vld [vmem:[%s211 + $0x70] sm:$0x33]
        %v258 = vld [vmem:[%s211 + $0x78] sm:$0x33]
        %v259 = vld [vmem:[%s2] sm:$0xff]
        %v260 = vld [vmem:[%s2 + $0x8] sm:$0xff]
        %262 = vset.pattern.permute.xlu0 0
        %263 = vperm.xlu0 %262, %v259
        %v264 = vpop.permute.xlu0 %263
        %267 = vset.pattern.permute.xlu0 0
        %268 = vperm.xlu0 %267, %v260
        %v269 = vpop.permute.xlu0 %268
        %v273 = vunpack.c.l.b16 %v241
        %v274 = vunpack.c.l.b16 %v242
        %v275 = vpack.c.b16 %v274, %v273
        %v292 = vunpack.c.l.b16 %v243
        %v293 = vunpack.c.h.b16 %v243
        %v294 = vunpack.c.l.b16 %v244
        %v295 = vunpack.c.h.b16 %v244
        %v296 = vunpack.c.l.b16 %v245
        %v297 = vunpack.c.h.b16 %v245
        %v298 = vunpack.c.l.b16 %v246
        %v299 = vunpack.c.h.b16 %v246
        %v300 = vunpack.c.l.b16 %v247
        %v301 = vunpack.c.h.b16 %v247
        %v302 = vunpack.c.l.b16 %v248
        %v303 = vunpack.c.h.b16 %v248
        %v304 = vunpack.c.l.b16 %v249
        %v305 = vunpack.c.h.b16 %v249
        %v306 = vunpack.c.l.b16 %v250
        %v307 = vunpack.c.h.b16 %v250
        %v308 = vunpack.c.l.b16 %v251
        %v309 = vunpack.c.h.b16 %v251
        %v310 = vunpack.c.l.b16 %v252
        %v311 = vunpack.c.h.b16 %v252
        %v312 = vunpack.c.l.b16 %v253
        %v313 = vunpack.c.h.b16 %v253
        %v314 = vunpack.c.l.b16 %v254
        %v315 = vunpack.c.h.b16 %v254
        %v316 = vunpack.c.l.b16 %v255
        %v317 = vunpack.c.h.b16 %v255
        %v318 = vunpack.c.l.b16 %v256
        %v319 = vunpack.c.h.b16 %v256
        %v320 = vunpack.c.l.b16 %v257
        %v321 = vunpack.c.h.b16 %v257
        %v322 = vunpack.c.l.b16 %v258
        %v323 = vunpack.c.h.b16 %v258
        %v324 = vpack.c.b16 %v300, %v292
        %v325 = vpack.c.b16 %v301, %v293
        %v326 = vpack.c.b16 %v302, %v294
        %v327 = vpack.c.b16 %v303, %v295
        %v328 = vpack.c.b16 %v304, %v296
        %v329 = vpack.c.b16 %v305, %v297
        %v330 = vpack.c.b16 %v306, %v298
        %v331 = vpack.c.b16 %v307, %v299
        %v332 = vpack.c.b16 %v316, %v308
        %v333 = vpack.c.b16 %v317, %v309
        %v334 = vpack.c.b16 %v318, %v310
        %v335 = vpack.c.b16 %v319, %v311
        %v336 = vpack.c.b16 %v320, %v312
        %v337 = vpack.c.b16 %v321, %v313
        %v338 = vpack.c.b16 %v322, %v314
        %v339 = vpack.c.b16 %v323, %v315
        %vm348 = vcmask 220160
        %v350 = vsel %vm348, %v275, 0
        %vm352 = vcmask 1044480
        %vm353 = vcmask 1045504
        %v354 = vsel %vm352, 4294967295, 65535
        %v355 = vsel %vm353, %v354, 0
        %v357 = vand.u32 %v332, %v355
        %v360 = vand.u32 %v333, %v355
        %v363 = vand.u32 %v334, %v355
        %v366 = vand.u32 %v335, %v355
        %v369 = vand.u32 %v336, %v355
        %v372 = vand.u32 %v337, %v355
        %v375 = vand.u32 %v338, %v355
        %v378 = vand.u32 %v339, %v355
        %380 = vmatprep.subr.bf16.mxu0 0
        %381 = vmatpush1.bf16.msra.mxu0 0
        %382 = vmatprep.subr.bf16.mxu0 0
        %383 = vmatpush1.bf16.msra.mxu0 0
        %384 = vmatprep.subr.bf16.mxu0 0
        %385 = vmatpush1.bf16.msra.mxu0 0
        %386 = vmatprep.subr.bf16.mxu0 0
        %387 = vmatpush1.bf16.msra.mxu0 0
        %388 = vmatprep.subr.bf16.mxu0 0
        %389 = vmatpush1.bf16.msra.mxu0 0
        %390 = vmatprep.subr.bf16.mxu0 0
        %391 = vmatpush1.bf16.msra.mxu0 0
        %392 = vmatprep.subr.bf16.mxu0 %v360
        %393 = vmatpush1.bf16.msra.mxu0 %v357
        %394 = vmatprep.subr.bf16.mxu0 %v325
        %395 = vmatpush1.bf16.msra.mxu0 %v324
        %396 = vmatprep.subr.bf16.mxu0 0
        %397 = vmatpush2.bf16.msra.mxu0 0
        %398 = vmatprep.subr.bf16.mxu0 0
        %399 = vmatpush2.bf16.msra.mxu0 0
        %400 = vmatprep.subr.bf16.mxu0 0
        %401 = vmatpush2.bf16.msra.mxu0 0
        %402 = vmatprep.subr.bf16.mxu0 0
        %403 = vmatpush2.bf16.msra.mxu0 0
        %404 = vmatprep.subr.bf16.mxu0 0
        %405 = vmatpush2.bf16.msra.mxu0 0
        %406 = vmatprep.subr.bf16.mxu0 0
        %407 = vmatpush2.bf16.msra.mxu0 0
        %408 = vmatprep.subr.bf16.mxu0 0
        %409 = vmatpush2.bf16.msra.mxu0 0
        %410 = vmatprep.subr.bf16.mxu0 0
        %411 = vmatpush2.bf16.msra.mxu0 0
        %412 = vmatprep.mubr.bf16.mxu0 0
        %413 = vmatmul.mubr.bf16.gmra.mxu0 %v350
        %v414 = vpop.f32.mrf.mxu0
        %v415 = vadd.f32 %v264, %v414
        %v416 = vpop.f32.mrf.mxu0
        %v417 = vadd.f32 %v264, %v416
        %v418 = vpop.f32.mrf.mxu0
        %v419 = vadd.f32 %v269, %v418
        %v420 = vpop.f32.mrf.mxu0
        %v421 = vadd.f32 %v269, %v420
        %422 = vdwg.mxu0
        %423 = vmatprep.subr.bf16.mxu0 0
        %424 = vmatpush1.bf16.msra.mxu0 0
        %425 = vmatprep.subr.bf16.mxu0 0
        %426 = vmatpush1.bf16.msra.mxu0 0
        %427 = vmatprep.subr.bf16.mxu0 0
        %428 = vmatpush1.bf16.msra.mxu0 0
        %429 = vmatprep.subr.bf16.mxu0 0
        %430 = vmatpush1.bf16.msra.mxu0 0
        %431 = vmatprep.subr.bf16.mxu0 0
        %432 = vmatpush1.bf16.msra.mxu0 0
        %433 = vmatprep.subr.bf16.mxu0 0
        %434 = vmatpush1.bf16.msra.mxu0 0
        %435 = vmatprep.subr.bf16.mxu0 %v366
        %436 = vmatpush1.bf16.msra.mxu0 %v363
        %437 = vmatprep.subr.bf16.mxu0 %v327
        %438 = vmatpush1.bf16.msra.mxu0 %v326
        %439 = vmatprep.subr.bf16.mxu0 0
        %440 = vmatpush2.bf16.msra.mxu0 0
        %441 = vmatprep.subr.bf16.mxu0 0
        %442 = vmatpush2.bf16.msra.mxu0 0
        %443 = vmatprep.subr.bf16.mxu0 0
        %444 = vmatpush2.bf16.msra.mxu0 0
        %445 = vmatprep.subr.bf16.mxu0 0
        %446 = vmatpush2.bf16.msra.mxu0 0
        %447 = vmatprep.subr.bf16.mxu0 0
        %448 = vmatpush2.bf16.msra.mxu0 0
        %449 = vmatprep.subr.bf16.mxu0 0
        %450 = vmatpush2.bf16.msra.mxu0 0
        %451 = vmatprep.subr.bf16.mxu0 0
        %452 = vmatpush2.bf16.msra.mxu0 0
        %453 = vmatprep.subr.bf16.mxu0 0
        %454 = vmatpush2.bf16.msra.mxu0 0
        %455 = vmatprep.mubr.bf16.mxu0 0
        %456 = vmatmul.mubr.bf16.gmra.mxu0 %v350
        %v457 = vpop.f32.mrf.mxu0
        %v458 = vadd.f32 %v264, %v457
        %v459 = vpop.f32.mrf.mxu0
        %v460 = vadd.f32 %v264, %v459
        %v461 = vpop.f32.mrf.mxu0
        %v462 = vadd.f32 %v269, %v461
        %v463 = vpop.f32.mrf.mxu0
        %v464 = vadd.f32 %v269, %v463
        %465 = vdwg.mxu0
        %466 = vmatprep.subr.bf16.mxu0 0
        %467 = vmatpush1.bf16.msra.mxu0 0
        %468 = vmatprep.subr.bf16.mxu0 0
        %469 = vmatpush1.bf16.msra.mxu0 0
        %470 = vmatprep.subr.bf16.mxu0 0
        %471 = vmatpush1.bf16.msra.mxu0 0
        %472 = vmatprep.subr.bf16.mxu0 0
        %473 = vmatpush1.bf16.msra.mxu0 0
        %474 = vmatprep.subr.bf16.mxu0 0
        %475 = vmatpush1.bf16.msra.mxu0 0
        %476 = vmatprep.subr.bf16.mxu0 0
        %477 = vmatpush1.bf16.msra.mxu0 0
        %478 = vmatprep.subr.bf16.mxu0 %v372
        %479 = vmatpush1.bf16.msra.mxu0 %v369
        %480 = vmatprep.subr.bf16.mxu0 %v329
        %481 = vmatpush1.bf16.msra.mxu0 %v328
        %482 = vmatprep.subr.bf16.mxu0 0
        %483 = vmatpush2.bf16.msra.mxu0 0
        %484 = vmatprep.subr.bf16.mxu0 0
        %485 = vmatpush2.bf16.msra.mxu0 0
        %486 = vmatprep.subr.bf16.mxu0 0
        %487 = vmatpush2.bf16.msra.mxu0 0
        %488 = vmatprep.subr.bf16.mxu0 0
        %489 = vmatpush2.bf16.msra.mxu0 0
        %490 = vmatprep.subr.bf16.mxu0 0
        %491 = vmatpush2.bf16.msra.mxu0 0
        %492 = vmatprep.subr.bf16.mxu0 0
        %493 = vmatpush2.bf16.msra.mxu0 0
        %494 = vmatprep.subr.bf16.mxu0 0
        %495 = vmatpush2.bf16.msra.mxu0 0
        %496 = vmatprep.subr.bf16.mxu0 0
        %497 = vmatpush2.bf16.msra.mxu0 0
        %498 = vmatprep.mubr.bf16.mxu0 0
        %499 = vmatmul.mubr.bf16.gmra.mxu0 %v350
        %v500 = vpop.f32.mrf.mxu0
        %v501 = vadd.f32 %v264, %v500
        %v502 = vpop.f32.mrf.mxu0
        %v503 = vadd.f32 %v264, %v502
        %v504 = vpop.f32.mrf.mxu0
        %v505 = vadd.f32 %v269, %v504
        %v506 = vpop.f32.mrf.mxu0
        %v507 = vadd.f32 %v269, %v506
        %508 = vdwg.mxu0
        %509 = vmatprep.subr.bf16.mxu0 0
        %510 = vmatpush1.bf16.msra.mxu0 0
        %511 = vmatprep.subr.bf16.mxu0 0
        %512 = vmatpush1.bf16.msra.mxu0 0
        %513 = vmatprep.subr.bf16.mxu0 0
        %514 = vmatpush1.bf16.msra.mxu0 0
        %515 = vmatprep.subr.bf16.mxu0 0
        %516 = vmatpush1.bf16.msra.mxu0 0
        %517 = vmatprep.subr.bf16.mxu0 0
        %518 = vmatpush1.bf16.msra.mxu0 0
        %519 = vmatprep.subr.bf16.mxu0 0
        %520 = vmatpush1.bf16.msra.mxu0 0
        %521 = vmatprep.subr.bf16.mxu0 %v378
        %522 = vmatpush1.bf16.msra.mxu0 %v375
        %523 = vmatprep.subr.bf16.mxu0 %v331
        %524 = vmatpush1.bf16.msra.mxu0 %v330
        %525 = vmatprep.subr.bf16.mxu0 0
        %526 = vmatpush2.bf16.msra.mxu0 0
        %527 = vmatprep.subr.bf16.mxu0 0
        %528 = vmatpush2.bf16.msra.mxu0 0
        %529 = vmatprep.subr.bf16.mxu0 0
        %530 = vmatpush2.bf16.msra.mxu0 0
        %531 = vmatprep.subr.bf16.mxu0 0
        %532 = vmatpush2.bf16.msra.mxu0 0
        %533 = vmatprep.subr.bf16.mxu0 0
        %534 = vmatpush2.bf16.msra.mxu0 0
        %535 = vmatprep.subr.bf16.mxu0 0
        %536 = vmatpush2.bf16.msra.mxu0 0
        %537 = vmatprep.subr.bf16.mxu0 0
        %538 = vmatpush2.bf16.msra.mxu0 0
        %539 = vmatprep.subr.bf16.mxu0 0
        %540 = vmatpush2.bf16.msra.mxu0 0
        %541 = vmatprep.mubr.bf16.mxu0 0
        %542 = vmatmul.mubr.bf16.gmra.mxu0 %v350
        %v543 = vpop.f32.mrf.mxu0
        %v544 = vadd.f32 %v264, %v543
        %v545 = vpop.f32.mrf.mxu0
        %v546 = vadd.f32 %v264, %v545
        %v547 = vpop.f32.mrf.mxu0
        %v548 = vadd.f32 %v269, %v547
        %v549 = vpop.f32.mrf.mxu0
        %v550 = vadd.f32 %v269, %v549
        %551 = vdwg.mxu0
        %552 = vst [vmem:[%s233] sm:$0xff] %v415
        %553 = vst [vmem:[%s233 + $0x8] sm:$0xff] %v417
        %554 = vst [vmem:[%s233 + $0x10] sm:$0xff] %v458
        %555 = vst [vmem:[%s233 + $0x18] sm:$0xff] %v460
        %556 = vst [vmem:[%s233 + $0x20] sm:$0xff] %v501
        %557 = vst [vmem:[%s233 + $0x28] sm:$0xff] %v503
        %558 = vst [vmem:[%s233 + $0x30] sm:$0xff] %v544
        %559 = vst [vmem:[%s233 + $0x38] sm:$0xff] %v546
        %560 = vst [vmem:[%s233 + $0x40] sm:$0xff] %v419
        %561 = vst [vmem:[%s233 + $0x48] sm:$0xff] %v421
        %562 = vst [vmem:[%s233 + $0x50] sm:$0xff] %v462
        %563 = vst [vmem:[%s233 + $0x58] sm:$0xff] %v464
        %564 = vst [vmem:[%s233 + $0x60] sm:$0xff] %v505
        %565 = vst [vmem:[%s233 + $0x68] sm:$0xff] %v507
        %566 = vst [vmem:[%s233 + $0x70] sm:$0xff] %v548
        %567 = vst [vmem:[%s233 + $0x78] sm:$0xff] %v550
        %p568 = scmp.eq.s32.totalorder %s23, 0
        // Predicated region
        $region37: #{tpu_custom_call.1} parent=31 // pred_check
          %p569 = pneg %p568
        $region38: #{tpu_custom_call.1} parent=31 // pred_check_branch
          %571 = sbr.rel (%p569) target = $region40
        $region39: #{tpu_custom_call.1} parent=31 // pred_region
          %vm572 = vcmask 7168
          %573 = vst.msk [vmem:[%s4] sm:$0xff] %vm572, 0.0
          %574 = vst.msk [vmem:[%s4 + $0x8] sm:$0xff] %vm572, 0.0
          %575 = vst.msk [vmem:[%s5] sm:$0xff] %vm572, 0.0
          %576 = vst.msk [vmem:[%s5 + $0x8] sm:$0xff] %vm572, 0.0
        $region40: #{tpu_custom_call.1} parent=31 // pred_fallthru
          _
        %v577 = vld [vmem:[%s4] sm:$0xff]
        %v578 = vld [vmem:[%s4 + $0x8] sm:$0xff]
        %v579 = vadd.f32 %v415, %v417
        %v580 = vadd.f32 %v579, %v458
        %v581 = vadd.f32 %v580, %v460
        %v582 = vadd.f32 %v581, %v501
        %v583 = vadd.f32 %v582, %v503
        %v584 = vadd.f32 %v583, %v544
        %v585 = vadd.f32 %v584, %v546
        %586 = vadd.xlane.f32.xlu0 %v585
        %v587 = vpop.xlane.xlu0 %586
        %v588 = vadd.f32 %v419, %v421
        %v589 = vadd.f32 %v588, %v462
        %v590 = vadd.f32 %v589, %v464
        %v591 = vadd.f32 %v590, %v505
        %v592 = vadd.f32 %v591, %v507
        %v593 = vadd.f32 %v592, %v548
        %v594 = vadd.f32 %v593, %v550
        %595 = vadd.xlane.f32.xlu0 %v594
        %v596 = vpop.xlane.xlu0 %595
        %v597 = vadd.f32 %v577, %v587
        %v598 = vadd.f32 %v578, %v596
        %vm599 = vcmask 7168
        %600 = vst.msk [vmem:[%s4] sm:$0xff] %vm599, %v597
        %601 = vst.msk [vmem:[%s4 + $0x8] sm:$0xff] %vm599, %v598
        %v602 = vld [vmem:[%s5] sm:$0xff]
        %v603 = vld [vmem:[%s5 + $0x8] sm:$0xff]
        %v604 = vmul.f32 %v415, %v415
        %v605 = vmul.f32 %v417, %v417
        %v606 = vmul.f32 %v458, %v458
        %v607 = vmul.f32 %v460, %v460
        %v608 = vmul.f32 %v501, %v501
        %v609 = vmul.f32 %v503, %v503
        %v610 = vmul.f32 %v544, %v544
        %v611 = vmul.f32 %v546, %v546
        %v612 = vmul.f32 %v419, %v419
        %v613 = vmul.f32 %v421, %v421
        %v614 = vmul.f32 %v462, %v462
        %v615 = vmul.f32 %v464, %v464
        %v616 = vmul.f32 %v505, %v505
        %v617 = vmul.f32 %v507, %v507
        %v618 = vmul.f32 %v548, %v548
        %v619 = vmul.f32 %v550, %v550
        %v620 = vadd.f32 %v604, %v605
        %v621 = vadd.f32 %v620, %v606
        %v622 = vadd.f32 %v621, %v607
        %v623 = vadd.f32 %v622, %v608
        %v624 = vadd.f32 %v623, %v609
        %v625 = vadd.f32 %v624, %v610
        %v626 = vadd.f32 %v625, %v611
        %627 = vadd.xlane.f32.xlu0 %v626
        %v628 = vpop.xlane.xlu0 %627
        %v629 = vadd.f32 %v612, %v613
        %v630 = vadd.f32 %v629, %v614
        %v631 = vadd.f32 %v630, %v615
        %v632 = vadd.f32 %v631, %v616
        %v633 = vadd.f32 %v632, %v617
        %v634 = vadd.f32 %v633, %v618
        %v635 = vadd.f32 %v634, %v619
        %636 = vadd.xlane.f32.xlu0 %v635
        %v637 = vpop.xlane.xlu0 %636
        %v638 = vadd.f32 %v602, %v628
        %v639 = vadd.f32 %v603, %v637
        %640 = vst.msk [vmem:[%s5] sm:$0xff] %vm599, %v638
        %641 = vst.msk [vmem:[%s5 + $0x8] sm:$0xff] %vm599, %v639
        %s642 = sand.u32 %s99, 1
        %s643 = scalar_lea.sflag [#allocation4], %s642
        %s644 = sand.u32 %s99, 1
        %s645 = smul.addr %s644, 128
        %s646 = scalar_lea.vmem [#allocation5], %s645
        // Predicated region
        $region41: #{tpu_custom_call.1} parent=31 // pred_check
          %p647 = pneg %p109
        $region42: #{tpu_custom_call.1} parent=31 // pred_check_branch
          %649 = sbr.rel (%p647) target = $region44
        $region43: #{tpu_custom_call.1} parent=31 // pred_region
          %s650 = smul.u32 8, %s23
          %s652 = ssub.s32 2048, 2048
          %653 = vsyncadd %s643, %s652
          %s654 = smul.addr %s650, 128
          %s655 = scalar_lea.hbm %s3, %s654
          %s656 = sshll.u32 %s646, 4
          %s657 = int_to_ptr.vmem [resolvable:$true] %s656
          %662 = dma.vmem_to_hbm [thread:$0]  %s657, 2048, %s655, %s643, 1024, 2048, 64
        $region44: #{tpu_custom_call.1} parent=31 // pred_fallthru
          _
        // Predicated region
        $region45: #{tpu_custom_call.1} parent=31 // pred_check
          %p663 = pneg %p130
        $region46: #{tpu_custom_call.1} parent=31 // pred_check_branch
          %665 = sbr.rel (%p663) target = $region48
        $region47: #{tpu_custom_call.1} parent=31 // pred_region
          _
        $region48: #{tpu_custom_call.1} parent=31 // pred_fallthru
          _
        // Predicated region
        $region49: #{tpu_custom_call.1} parent=31 // pred_check
          %p666 = pneg %p151
        $region50: #{tpu_custom_call.1} parent=31 // pred_check_branch
          %668 = sbr.rel (%p666) target = $region52
        $region51: #{tpu_custom_call.1} parent=31 // pred_region
          _
        $region52: #{tpu_custom_call.1} parent=31 // pred_fallthru
          _
        // Predicated region
        $region53: #{tpu_custom_call.1} parent=31 // pred_check
          %p669 = pneg %p130
        $region54: #{tpu_custom_call.1} parent=31 // pred_check_branch
          %671 = sbr.rel (%p669) target = $region56
        $region55: #{tpu_custom_call.1} parent=31 // pred_region
          _
        $region56: #{tpu_custom_call.1} parent=31 // pred_fallthru
          _
        // Predicated region
        $region57: #{tpu_custom_call.1} parent=31 // pred_check
          %p672 = pneg %p151
        $region58: #{tpu_custom_call.1} parent=31 // pred_check_branch
          %674 = sbr.rel (%p672) target = $region60
        $region59: #{tpu_custom_call.1} parent=31 // pred_region
          _
        $region60: #{tpu_custom_call.1} parent=31 // pred_fallthru
          _
      $region32: #{tpu_custom_call.1} parent=5 // pred_fallthru
        _
      %p675 = scmp.le.s32.totalorder 2, %s18
      // Predicated region
      $region61: #{tpu_custom_call.1} parent=5 // pred_check
        %p676 = pneg %p675
      $region62: #{tpu_custom_call.1} parent=5 // pred_check_branch
        %678 = sbr.rel (%p676) target = $region64
      $region63: #{tpu_custom_call.1} parent=5 // pred_region
        %s679 = ssub.s32 %s18, 2
        // Predicated region
        $region65: #{tpu_custom_call.1} parent=63 // pred_check
          %p680 = pneg %p115
        $region66: #{tpu_custom_call.1} parent=63 // pred_check_branch
          %682 = sbr.rel (%p680) target = $region68
        $region67: #{tpu_custom_call.1} parent=63 // pred_region
          %s683 = sand.u32 %s100, 1
          %s684 = scalar_lea.sflag [#allocation4], %s683
          %s685 = sand.u32 %s100, 1
          %s686 = smul.addr %s685, 128
          %s687 = scalar_lea.vmem [#allocation5], %s686
          %688 = dma.done %s684, 2048
        $region68: #{tpu_custom_call.1} parent=63 // pred_fallthru
          _
      $region64: #{tpu_custom_call.1} parent=5 // pred_fallthru
        _
    $region6: #{tpu_custom_call.1} parent=1 // loop_footer
      %s22 = sadd.s32 1, %s18
    $region7: #{tpu_custom_call.1} parent=1 // loop_footer_branch
      %17 = sbr.rel target = $region3
    $region8: #{tpu_custom_call.1} parent=1 // loop_exit
      _
    %689 = vsyncpa [#allocation3], 1
    %s690 = scalar_lea.sflag [#allocation3], 1
    %691 = vsyncpa %s690, 1
    %692 = vsyncpa [#allocation4], 1
    %s693 = scalar_lea.sflag [#allocation4], 1
    %694 = vsyncpa %s693, 1

</llo_original>
